<compile_context>
chip_gen: v7x
topology: tpu7x:2x2x1
jax: 0.10.0
libtpu: 0.0.40
codegen_flags: <defaults>
</compile_context>

<pallas_src>
import jax
import jax.numpy as jnp
from jax import lax
from jax.experimental import pallas as pl
from jax.experimental.pallas import tpu as pltpu


# ----------------------------------------------------------------------------
# Pallas kernel: one invocation per batch block, full sequence resident in VMEM.
# ----------------------------------------------------------------------------
def _lstm_recurrence_kernel(g_ref, whh_ref, h0_ref, c0_ref, out_ref):
    """
    g_ref   : (T, BB, 4H) f32 — precomputed x @ W_ih + (b_ih + b_hh), time-major,
              lane-dense (4H is a multiple of 128 for H=32).
    whh_ref : (H, 4H)     hidden->gate weights (transposed; PyTorch gate order i,f,g,o)
    h0_ref  : (BB, H)
    c0_ref  : (BB, H)
    out_ref : (BB, T*H)   batch-first, lane-dense output slab (f32)
    """
    T, BB, G = g_ref.shape
    H = h0_ref.shape[-1]

    whh = whh_ref[...]
    h = h0_ref[...].astype(jnp.float32)
    c = c0_ref[...].astype(jnp.float32)

    # Full-width activation constants, hoisted out of the t-loop:
    #   sigmoid(x) = 0.5 * tanh(0.5 * x) + 0.5   on the i/f/o gate lanes,
    #   tanh(x)    = 1.0 * tanh(1.0 * x) + 0.0   on the g gate lanes.
    lane = lax.broadcasted_iota(jnp.int32, (1, G), 1)
    is_g = (lane >= 2 * H) & (lane < 3 * H)
    scale = jnp.where(is_g, 1.0, 0.5).astype(jnp.float32)   # pre-scale == post-mul
    shift = jnp.where(is_g, 0.0, 0.5).astype(jnp.float32)

    # Group per-step (BB, H) outputs into 128-lane-aligned slabs → unmasked full-width stores.
    chunk = (128 // H) if (H < 128 and 128 % H == 0) else 1
    buf = []

    # Fully unrolled: T = num_decode_steps is small for DeepAR decoding.
    # TODO(synk): for long horizons, switch to lax.fori_loop with h/c carried and
    # per-step pl.ds(pl.multiple_of(t*BB, BB), BB) reads of a VMEM-staged g_all to
    # bound vreg pressure and compile time.
    for t in range(T):
        gates = g_ref[t] + jnp.dot(h.astype(whh.dtype), whh,
                                   preferred_element_type=jnp.float32)   # (BB, 4H)
        act = jnp.tanh(gates * scale) * scale + shift                    # ONE EUP pass
        i_g = act[:, 0 * H:1 * H]
        f_g = act[:, 1 * H:2 * H]
        g_g = act[:, 2 * H:3 * H]
        o_g = act[:, 3 * H:4 * H]
        c = f_g * c + i_g * g_g
        h = o_g * jnp.tanh(c)
        buf.append(h)
        if len(buf) == chunk or t == T - 1:
            start = (t + 1 - len(buf)) * H
            slab = buf[0] if len(buf) == 1 else jnp.concatenate(buf, axis=-1)
            out_ref[:, start:start + len(buf) * H] = slab.astype(out_ref.dtype)
            buf = []


# ----------------------------------------------------------------------------
# Tiling helpers
# ----------------------------------------------------------------------------
def _choose_block_batch(batch, target):
    """Batch tile: multiple of 8, aims for >=2 blocks (v7x megacore) when batch allows,
    capped at `target` (128 keeps per-step vreg pressure sane on all generations;
    256 is viable on v6e/v7x at the cost of gate-math spills)."""
    b8 = -(-batch // 8) * 8
    if b8 <= 8:
        bb = 8
    else:
        bb = min(target, b8 // 2)          # ensure at least 2 batch blocks
        bb = max(8, (bb // 8) * 8)
    bp = -(-batch // bb) * bb
    return bb, bp


def _vmem_limit_bytes(T, bb, H, w_itemsize):
    g = T * bb * 4 * H * 4                 # g_all block (f32)
    o = bb * T * H * 4                     # output block (f32)
    s = 2 * bb * H * 4                     # h0 + c0 blocks
    w = H * 4 * H * w_itemsize             # W_hh
    needed = 2 * (g + o + s + w) + (4 << 20)   # double-buffered tiles + headroom
    if needed <= (24 << 20):
        return None                        # default scoped limit is plenty
    return int(min(needed, 64 << 20))      # stay within v7x physical VMEM


def lstm_recurrence_pallas(g_all, w_hh_t, h0, c0, *, block_batch):
    """
    g_all : (T, Bp, 4H) f32 gate pre-activations (bias folded in), Bp % block_batch == 0
    h0/c0 : (Bp, H)
    Returns (Bp, T*H) f32 — batch-first, lane-dense output slab.
    """
    T, Bp, G = g_all.shape
    H = h0.shape[-1]
    assert G == 4 * H
    assert Bp % block_batch == 0
    nb = Bp // block_batch

    grid_spec = pltpu.PrefetchScalarGridSpec(
        num_scalar_prefetch=0,
        grid=(nb,),                                               # independent batch blocks
        in_specs=[
            pl.BlockSpec((T, block_batch, G), lambda b: (0, b, 0)),   # gate pre-activations
            pl.BlockSpec((H, G), lambda b: (0, 0)),                   # W_hh (resident)
            pl.BlockSpec((block_batch, H), lambda b: (b, 0)),         # h0 block
            pl.BlockSpec((block_batch, H), lambda b: (b, 0)),         # c0 block
        ],
        out_specs=pl.BlockSpec((block_batch, T * H), lambda b: (b, 0)),
    )

    return pl.pallas_call(
        _lstm_recurrence_kernel,
        out_shape=jax.ShapeDtypeStruct((Bp, T * H), jnp.float32),
        grid_spec=grid_spec,
        compiler_params=pltpu.CompilerParams(
            # batch blocks are independent → splittable across TensorCores (v7x)
            dimension_semantics=("parallel",),
            vmem_limit_bytes=_vmem_limit_bytes(T, block_batch, H,
                                               w_hh_t.dtype.itemsize),
        ),
    )(g_all, w_hh_t, h0, c0)


# ----------------------------------------------------------------------------
# Decoder wrapper (parameter container + forward)
# ----------------------------------------------------------------------------
class DecoderPallas:
    def __init__(self, input_size, hidden_size, num_layers, num_cats,
                 embedding_dim, num_decode_steps, key):
        assert num_layers == 1, "kernel implements the single-layer LSTM case"
        self.input_size = input_size
        self.hidden_size = hidden_size
        self.embedding_dim = embedding_dim
        self.num_decode_steps = num_decode_steps

        D = input_size + embedding_dim + 1
        H = hidden_size
        k = jax.random.split(key, 6)
        s = 1.0 / jnp.sqrt(H)
        # PyTorch LSTM params: weight_ih (4H, D), weight_hh (4H, H), biases (4H,)
        w_ih = jax.random.uniform(k[0], (4 * H, D), jnp.float32, -s, s)
        w_hh = jax.random.uniform(k[1], (4 * H, H), jnp.float32, -s, s)
        b_ih = jax.random.uniform(k[2], (4 * H,), jnp.float32, -s, s)
        b_hh = jax.random.uniform(k[3], (4 * H,), jnp.float32, -s, s)
        # Kernel/wrapper use transposed weights and a combined bias.
        self.w_ih_t = jnp.transpose(w_ih)                      # (D, 4H)
        self.w_hh_t = jnp.transpose(w_hh)                      # (H, 4H)
        self.bias = (b_ih + b_hh).reshape(1, 4 * H)            # (1, 4H)
        # Embedding table (nn.Embedding init ~ N(0, 1))
        self.embedding = jax.random.normal(k[4], (num_cats, embedding_dim),
                                           jnp.float32)
        # Likelihood fc params exist in the module but are unused by forward().
        self.fc_w = jax.random.uniform(k[5], (2, H), jnp.float32,
                                       -1.0 / jnp.sqrt(H), 1.0 / jnp.sqrt(H))
        # TODO(synk): predict() (autoregressive Normal sampling via Likelihood) is
        # host-side control flow; only forward() is translated to a kernel.

    def forward(self, x, cat, y, h0, c0, *,
                matmul_dtype=jnp.bfloat16, block_batch_target=128):
        """
        x:   (B, T, input_size) f32
        cat: (B, T) int32
        y:   (B, T) f32
        h0:  (1, B, H) f32
        c0:  (1, B, H) f32
        returns h: (B, T, H) f32
        """
        B, T, _ = x.shape
        H = self.hidden_size

        cat_emb = jnp.take(self.embedding, cat, axis=0)        # (B, T, E)  XLA glue
        # Build the packed LSTM input directly in time-major order (single fused concat).
        x_tbd = jnp.concatenate(
            [jnp.transpose(x, (1, 0, 2)),
             jnp.transpose(cat_emb, (1, 0, 2)),
             jnp.transpose(y)[..., None]],
            axis=-1)                                            # (T, B, D)

        # Hoisted input projection as ONE XLA GEMM over all T steps; the kernel input
        # becomes lane-dense 4H-wide gate pre-activations instead of lane-sparse x.
        if matmul_dtype is not None:
            # bf16 MXU operands, f32 accumulation (v5e/v6e/v7x native).  Inside the
            # kernel h is re-cast to bf16 each step for h@W_hh — rounding compounds
            # over long decode horizons; fine at the tested tolerance.
            g_all = jnp.dot(x_tbd.astype(matmul_dtype),
                            self.w_ih_t.astype(matmul_dtype),
                            preferred_element_type=jnp.float32)
            w_hh = self.w_hh_t.astype(matmul_dtype)
        else:
            g_all = jnp.dot(x_tbd, self.w_ih_t, preferred_element_type=jnp.float32)
            w_hh = self.w_hh_t
        g_all = g_all + self.bias                               # (T, B, 4H), bias folded

        # Pick the batch tile and pad the batch to a multiple of it (padding is tied
        # to the chosen block_batch; padded rows are discarded after the kernel).
        bb, Bp = _choose_block_batch(B, block_batch_target)
        if Bp != B:
            pad = Bp - B
            g_all = jnp.pad(g_all, ((0, 0), (0, pad), (0, 0)))
            h0p = jnp.pad(h0[0], ((0, pad), (0, 0)))
            c0p = jnp.pad(c0[0], ((0, pad), (0, 0)))
        else:
            h0p, c0p = h0[0], c0[0]

        out = lstm_recurrence_pallas(g_all, w_hh, h0p, c0p,
                                     block_batch=bb)            # (Bp, T*H)
        # Contiguous reshape only — no output transpose pass.
        return out[:B].reshape(B, T, H)


# ----------------------------------------------------------------------------
# Pure-JAX reference LSTM for a sanity check
# ----------------------------------------------------------------------------
def _ref_lstm(x_btd, w_ih_t, w_hh_t, b, h0, c0):
    B, T, D = x_btd.shape
    H = h0.shape[-1]

    def step(carry, xt):
        h, c = carry
        gates = xt @ w_ih_t + h @ w_hh_t + b
        i = jax.nn.sigmoid(gates[:, 0 * H:1 * H])
        f = jax.nn.sigmoid(gates[:, 1 * H:2 * H])
        g = jnp.tanh(gates[:, 2 * H:3 * H])
        o = jax.nn.sigmoid(gates[:, 3 * H:4 * H])
        c = f * c + i * g
        h = o * jnp.tanh(c)
        return (h, c), h

    (_, _), hs = jax.lax.scan(step, (h0, c0), jnp.transpose(x_btd, (1, 0, 2)))
    return jnp.transpose(hs, (1, 0, 2))


if __name__ == "__main__":
    # Small shapes consistent with the module's forward().
    batch_size = 2
    input_size = 4
    hidden_size = 32
    embedding_dim = 3
    num_cats = 5
    num_decode_steps = 8

    key = jax.random.PRNGKey(0)
    k_param, kx, kc, ky, kh, kcc = jax.random.split(key, 6)

    dec = DecoderPallas(input_size, hidden_size, num_layers=1,
                        num_cats=num_cats, embedding_dim=embedding_dim,
                        num_decode_steps=num_decode_steps, key=k_param)

    x = jax.random.normal(kx, (batch_size, num_decode_steps, input_size),
                          jnp.float32)
    cat = jax.random.randint(kc, (batch_size, num_decode_steps), 0, num_cats)
    y = jax.random.normal(ky, (batch_size, num_decode_steps), jnp.float32)
    h0 = jax.random.normal(kh, (1, batch_size, hidden_size), jnp.float32)
    c0 = jax.random.normal(kcc, (1, batch_size, hidden_size), jnp.float32)

    # Pure-JAX reference
    cat_emb = jnp.take(dec.embedding, cat, axis=0)
    x_in = jnp.concatenate([x, cat_emb, y[..., None]], axis=2)
    h_ref = _ref_lstm(x_in, dec.w_ih_t, dec.w_hh_t, dec.bias, h0[0], c0[0])

    # --- f32 path (exact check) ----------------------------------------------
    h_f32 = dec.forward(x, cat, y, h0, c0, matmul_dtype=None)
    h_f32 = jax.block_until_ready(h_f32)
    assert h_f32.shape == (batch_size, num_decode_steps, hidden_size)
    assert jnp.allclose(h_f32, h_ref, atol=1e-5, rtol=1e-5)

    # --- default bf16-MXU-operand path (f32 accumulate/elementwise), loose check
    h_bf16 = dec.forward(x, cat, y, h0, c0)
    h_bf16 = jax.block_until_ready(h_bf16)
    assert jnp.allclose(h_bf16, h_ref, atol=3e-2, rtol=3e-2)

    print("KERNEL_OK")
</pallas_src>

<mosaic_0001>
module attributes {stable_mosaic.version = 11 : i64} {
  func.func @_lstm_recurrence_kernel(%arg0: i32, %arg1: memref<8x8x128xf32, #tpu.memory_space<vmem>>, %arg2: memref<32x128xf32, #tpu.memory_space<vmem>>, %arg3: memref<8x32xf32, #tpu.memory_space<vmem>>, %arg4: memref<8x32xf32, #tpu.memory_space<vmem>>, %arg5: memref<8x256xf32, #tpu.memory_space<vmem>>) attributes {dimension_semantics = [#tpu.dimension_semantics<parallel>], iteration_bounds = array<i64: 1>, scalar_prefetch = 0 : i64, scratch_operands = 0 : i64, tpu.core_type = #tpu.core_type<tc>, window_params = [{transform_indices = @transform_0, window_bounds = array<i64: 8, 8, 128>}, {pipeline_mode = #tpu.pipeline_mode<synchronous>, transform_indices = @transform_1, window_bounds = array<i64: 32, 128>}, {transform_indices = @transform_2, window_bounds = array<i64: 8, 32>}, {transform_indices = @transform_3, window_bounds = array<i64: 8, 32>}, {transform_indices = @transform_4, window_bounds = array<i64: 8, 256>}]} {
    %c0 = arith.constant 0 : index
    %c0_0 = arith.constant 0 : index
    %0 = vector.load %arg2[%c0, %c0_0] : memref<32x128xf32, #tpu.memory_space<vmem>>, vector<32x128xf32>
    %c0_1 = arith.constant 0 : index
    %c0_2 = arith.constant 0 : index
    %1 = vector.load %arg3[%c0_1, %c0_2] : memref<8x32xf32, #tpu.memory_space<vmem>>, vector<8x32xf32>
    %c0_3 = arith.constant 0 : index
    %c0_4 = arith.constant 0 : index
    %2 = vector.load %arg4[%c0_3, %c0_4] : memref<8x32xf32, #tpu.memory_space<vmem>>, vector<8x32xf32>
    %3 = tpu.iota {dimensions = array<i32: 1>} : vector<1x128xi32>
    %c64_i32 = arith.constant 64 : i32
    %4 = vector.broadcast %c64_i32 : i32 to vector<1x128xi32>
    %5 = arith.cmpi sge, %3, %4 : vector<1x128xi32>
    %c96_i32 = arith.constant 96 : i32
    %6 = vector.broadcast %c96_i32 : i32 to vector<1x128xi32>
    %7 = arith.cmpi slt, %3, %6 : vector<1x128xi32>
    %8 = arith.andi %5, %7 : vector<1x128xi1>
    %cst = arith.constant 1.000000e+00 : f32
    %cst_5 = arith.constant 5.000000e-01 : f32
    %9 = vector.broadcast %cst : f32 to vector<1x128xf32>
    %10 = vector.broadcast %cst_5 : f32 to vector<1x128xf32>
    %11 = arith.select %8, %9, %10 : vector<1x128xi1>, vector<1x128xf32>
    %cst_6 = arith.constant 0.000000e+00 : f32
    %cst_7 = arith.constant 5.000000e-01 : f32
    %12 = vector.broadcast %cst_6 : f32 to vector<1x128xf32>
    %13 = vector.broadcast %cst_7 : f32 to vector<1x128xf32>
    %14 = arith.select %8, %12, %13 : vector<1x128xi1>, vector<1x128xf32>
    %c0_8 = arith.constant 0 : index
    %c0_9 = arith.constant 0 : index
    %c0_10 = arith.constant 0 : index
    %15 = vector.load %arg1[%c0_8, %c0_9, %c0_10] : memref<8x8x128xf32, #tpu.memory_space<vmem>>, vector<1x8x128xf32>
    %16 = vector.shape_cast %15 : vector<1x8x128xf32> to vector<8x128xf32>
    %cst_11 = arith.constant dense<0.000000e+00> : vector<8x128xf32>
    %17 = tpu.matmul %1, %0, %cst_11 {dimension_numbers = #tpu.dot_dimension_numbers<[1], [0], [0], [1], [0, 0, 1, 1], [], []>} : vector<8x32xf32>, vector<32x128xf32>, vector<8x128xf32> -> vector<8x128xf32>
    %18 = arith.addf %16, %17 : vector<8x128xf32>
    %19 = vector.broadcast %11 : vector<1x128xf32> to vector<8x128xf32>
    %20 = arith.mulf %18, %19 : vector<8x128xf32>
    %21 = math.tanh %20 : vector<8x128xf32>
    %22 = vector.broadcast %11 : vector<1x128xf32> to vector<8x128xf32>
    %23 = arith.mulf %21, %22 : vector<8x128xf32>
    %24 = vector.broadcast %14 : vector<1x128xf32> to vector<8x128xf32>
    %25 = arith.addf %23, %24 : vector<8x128xf32>
    %26 = vector.extract_strided_slice %25 {offsets = [0, 0], sizes = [8, 32], strides = [1, 1]} : vector<8x128xf32> to vector<8x32xf32>
    %27 = vector.extract_strided_slice %25 {offsets = [0, 32], sizes = [8, 32], strides = [1, 1]} : vector<8x128xf32> to vector<8x32xf32>
    %28 = vector.extract_strided_slice %25 {offsets = [0, 64], sizes = [8, 32], strides = [1, 1]} : vector<8x128xf32> to vector<8x32xf32>
    %29 = vector.extract_strided_slice %25 {offsets = [0, 96], sizes = [8, 32], strides = [1, 1]} : vector<8x128xf32> to vector<8x32xf32>
    %30 = arith.mulf %27, %2 : vector<8x32xf32>
    %31 = arith.mulf %26, %28 : vector<8x32xf32>
    %32 = arith.addf %30, %31 : vector<8x32xf32>
    %33 = math.tanh %32 : vector<8x32xf32>
    %34 = arith.mulf %29, %33 : vector<8x32xf32>
    %c1 = arith.constant 1 : index
    %c0_12 = arith.constant 0 : index
    %c0_13 = arith.constant 0 : index
    %35 = vector.load %arg1[%c1, %c0_12, %c0_13] : memref<8x8x128xf32, #tpu.memory_space<vmem>>, vector<1x8x128xf32>
    %36 = vector.shape_cast %35 : vector<1x8x128xf32> to vector<8x128xf32>
    %cst_14 = arith.constant dense<0.000000e+00> : vector<8x128xf32>
    %37 = tpu.matmul %34, %0, %cst_14 {dimension_numbers = #tpu.dot_dimension_numbers<[1], [0], [0], [1], [0, 0, 1, 1], [], []>} : vector<8x32xf32>, vector<32x128xf32>, vector<8x128xf32> -> vector<8x128xf32>
    %38 = arith.addf %36, %37 : vector<8x128xf32>
    %39 = vector.broadcast %11 : vector<1x128xf32> to vector<8x128xf32>
    %40 = arith.mulf %38, %39 : vector<8x128xf32>
    %41 = math.tanh %40 : vector<8x128xf32>
    %42 = vector.broadcast %11 : vector<1x128xf32> to vector<8x128xf32>
    %43 = arith.mulf %41, %42 : vector<8x128xf32>
    %44 = vector.broadcast %14 : vector<1x128xf32> to vector<8x128xf32>
    %45 = arith.addf %43, %44 : vector<8x128xf32>
    %46 = vector.extract_strided_slice %45 {offsets = [0, 0], sizes = [8, 32], strides = [1, 1]} : vector<8x128xf32> to vector<8x32xf32>
    %47 = vector.extract_strided_slice %45 {offsets = [0, 32], sizes = [8, 32], strides = [1, 1]} : vector<8x128xf32> to vector<8x32xf32>
    %48 = vector.extract_strided_slice %45 {offsets = [0, 64], sizes = [8, 32], strides = [1, 1]} : vector<8x128xf32> to vector<8x32xf32>
    %49 = vector.extract_strided_slice %45 {offsets = [0, 96], sizes = [8, 32], strides = [1, 1]} : vector<8x128xf32> to vector<8x32xf32>
    %50 = arith.mulf %47, %32 : vector<8x32xf32>
    %51 = arith.mulf %46, %48 : vector<8x32xf32>
    %52 = arith.addf %50, %51 : vector<8x32xf32>
    %53 = math.tanh %52 : vector<8x32xf32>
    %54 = arith.mulf %49, %53 : vector<8x32xf32>
    %c2 = arith.constant 2 : index
    %c0_15 = arith.constant 0 : index
    %c0_16 = arith.constant 0 : index
    %55 = vector.load %arg1[%c2, %c0_15, %c0_16] : memref<8x8x128xf32, #tpu.memory_space<vmem>>, vector<1x8x128xf32>
    %56 = vector.shape_cast %55 : vector<1x8x128xf32> to vector<8x128xf32>
    %cst_17 = arith.constant dense<0.000000e+00> : vector<8x128xf32>
    %57 = tpu.matmul %54, %0, %cst_17 {dimension_numbers = #tpu.dot_dimension_numbers<[1], [0], [0], [1], [0, 0, 1, 1], [], []>} : vector<8x32xf32>, vector<32x128xf32>, vector<8x128xf32> -> vector<8x128xf32>
    %58 = arith.addf %56, %57 : vector<8x128xf32>
    %59 = vector.broadcast %11 : vector<1x128xf32> to vector<8x128xf32>
    %60 = arith.mulf %58, %59 : vector<8x128xf32>
    %61 = math.tanh %60 : vector<8x128xf32>
    %62 = vector.broadcast %11 : vector<1x128xf32> to vector<8x128xf32>
    %63 = arith.mulf %61, %62 : vector<8x128xf32>
    %64 = vector.broadcast %14 : vector<1x128xf32> to vector<8x128xf32>
    %65 = arith.addf %63, %64 : vector<8x128xf32>
    %66 = vector.extract_strided_slice %65 {offsets = [0, 0], sizes = [8, 32], strides = [1, 1]} : vector<8x128xf32> to vector<8x32xf32>
    %67 = vector.extract_strided_slice %65 {offsets = [0, 32], sizes = [8, 32], strides = [1, 1]} : vector<8x128xf32> to vector<8x32xf32>
    %68 = vector.extract_strided_slice %65 {offsets = [0, 64], sizes = [8, 32], strides = [1, 1]} : vector<8x128xf32> to vector<8x32xf32>
    %69 = vector.extract_strided_slice %65 {offsets = [0, 96], sizes = [8, 32], strides = [1, 1]} : vector<8x128xf32> to vector<8x32xf32>
    %70 = arith.mulf %67, %52 : vector<8x32xf32>
    %71 = arith.mulf %66, %68 : vector<8x32xf32>
    %72 = arith.addf %70, %71 : vector<8x32xf32>
    %73 = math.tanh %72 : vector<8x32xf32>
    %74 = arith.mulf %69, %73 : vector<8x32xf32>
    %c3 = arith.constant 3 : index
    %c0_18 = arith.constant 0 : index
    %c0_19 = arith.constant 0 : index
    %75 = vector.load %arg1[%c3, %c0_18, %c0_19] : memref<8x8x128xf32, #tpu.memory_space<vmem>>, vector<1x8x128xf32>
    %76 = vector.shape_cast %75 : vector<1x8x128xf32> to vector<8x128xf32>
    %cst_20 = arith.constant dense<0.000000e+00> : vector<8x128xf32>
    %77 = tpu.matmul %74, %0, %cst_20 {dimension_numbers = #tpu.dot_dimension_numbers<[1], [0], [0], [1], [0, 0, 1, 1], [], []>} : vector<8x32xf32>, vector<32x128xf32>, vector<8x128xf32> -> vector<8x128xf32>
    %78 = arith.addf %76, %77 : vector<8x128xf32>
    %79 = vector.broadcast %11 : vector<1x128xf32> to vector<8x128xf32>
    %80 = arith.mulf %78, %79 : vector<8x128xf32>
    %81 = math.tanh %80 : vector<8x128xf32>
    %82 = vector.broadcast %11 : vector<1x128xf32> to vector<8x128xf32>
    %83 = arith.mulf %81, %82 : vector<8x128xf32>
    %84 = vector.broadcast %14 : vector<1x128xf32> to vector<8x128xf32>
    %85 = arith.addf %83, %84 : vector<8x128xf32>
    %86 = vector.extract_strided_slice %85 {offsets = [0, 0], sizes = [8, 32], strides = [1, 1]} : vector<8x128xf32> to vector<8x32xf32>
    %87 = vector.extract_strided_slice %85 {offsets = [0, 32], sizes = [8, 32], strides = [1, 1]} : vector<8x128xf32> to vector<8x32xf32>
    %88 = vector.extract_strided_slice %85 {offsets = [0, 64], sizes = [8, 32], strides = [1, 1]} : vector<8x128xf32> to vector<8x32xf32>
    %89 = vector.extract_strided_slice %85 {offsets = [0, 96], sizes = [8, 32], strides = [1, 1]} : vector<8x128xf32> to vector<8x32xf32>
    %90 = arith.mulf %87, %72 : vector<8x32xf32>
    %91 = arith.mulf %86, %88 : vector<8x32xf32>
    %92 = arith.addf %90, %91 : vector<8x32xf32>
    %93 = math.tanh %92 : vector<8x32xf32>
    %94 = arith.mulf %89, %93 : vector<8x32xf32>
    %95 = tpu.concatenate %34, %54, %74, %94 in 1 : vector<8x32xf32>, vector<8x32xf32>, vector<8x32xf32>, vector<8x32xf32> -> vector<8x128xf32>
    %c0_21 = arith.constant 0 : index
    %c0_22 = arith.constant 0 : index
    %96 = vector.load %arg5[%c0_21, %c0_22] : memref<8x256xf32, #tpu.memory_space<vmem>>, vector<8x128xf32>
    tpu.vector_store %arg5[%c0_21, %c0_22], %95 {strides = array<i32>} : memref<8x256xf32, #tpu.memory_space<vmem>>, vector<8x128xf32>,
    %c4 = arith.constant 4 : index
    %c0_23 = arith.constant 0 : index
    %c0_24 = arith.constant 0 : index
    %97 = vector.load %arg1[%c4, %c0_23, %c0_24] : memref<8x8x128xf32, #tpu.memory_space<vmem>>, vector<1x8x128xf32>
    %98 = vector.shape_cast %97 : vector<1x8x128xf32> to vector<8x128xf32>
    %cst_25 = arith.constant dense<0.000000e+00> : vector<8x128xf32>
    %99 = tpu.matmul %94, %0, %cst_25 {dimension_numbers = #tpu.dot_dimension_numbers<[1], [0], [0], [1], [0, 0, 1, 1], [], []>} : vector<8x32xf32>, vector<32x128xf32>, vector<8x128xf32> -> vector<8x128xf32>
    %100 = arith.addf %98, %99 : vector<8x128xf32>
    %101 = vector.broadcast %11 : vector<1x128xf32> to vector<8x128xf32>
    %102 = arith.mulf %100, %101 : vector<8x128xf32>
    %103 = math.tanh %102 : vector<8x128xf32>
    %104 = vector.broadcast %11 : vector<1x128xf32> to vector<8x128xf32>
    %105 = arith.mulf %103, %104 : vector<8x128xf32>
    %106 = vector.broadcast %14 : vector<1x128xf32> to vector<8x128xf32>
    %107 = arith.addf %105, %106 : vector<8x128xf32>
    %108 = vector.extract_strided_slice %107 {offsets = [0, 0], sizes = [8, 32], strides = [1, 1]} : vector<8x128xf32> to vector<8x32xf32>
    %109 = vector.extract_strided_slice %107 {offsets = [0, 32], sizes = [8, 32], strides = [1, 1]} : vector<8x128xf32> to vector<8x32xf32>
    %110 = vector.extract_strided_slice %107 {offsets = [0, 64], sizes = [8, 32], strides = [1, 1]} : vector<8x128xf32> to vector<8x32xf32>
    %111 = vector.extract_strided_slice %107 {offsets = [0, 96], sizes = [8, 32], strides = [1, 1]} : vector<8x128xf32> to vector<8x32xf32>
    %112 = arith.mulf %109, %92 : vector<8x32xf32>
    %113 = arith.mulf %108, %110 : vector<8x32xf32>
    %114 = arith.addf %112, %113 : vector<8x32xf32>
    %115 = math.tanh %114 : vector<8x32xf32>
    %116 = arith.mulf %111, %115 : vector<8x32xf32>
    %c5 = arith.constant 5 : index
    %c0_26 = arith.constant 0 : index
    %c0_27 = arith.constant 0 : index
    %117 = vector.load %arg1[%c5, %c0_26, %c0_27] : memref<8x8x128xf32, #tpu.memory_space<vmem>>, vector<1x8x128xf32>
    %118 = vector.shape_cast %117 : vector<1x8x128xf32> to vector<8x128xf32>
    %cst_28 = arith.constant dense<0.000000e+00> : vector<8x128xf32>
    %119 = tpu.matmul %116, %0, %cst_28 {dimension_numbers = #tpu.dot_dimension_numbers<[1], [0], [0], [1], [0, 0, 1, 1], [], []>} : vector<8x32xf32>, vector<32x128xf32>, vector<8x128xf32> -> vector<8x128xf32>
    %120 = arith.addf %118, %119 : vector<8x128xf32>
    %121 = vector.broadcast %11 : vector<1x128xf32> to vector<8x128xf32>
    %122 = arith.mulf %120, %121 : vector<8x128xf32>
    %123 = math.tanh %122 : vector<8x128xf32>
    %124 = vector.broadcast %11 : vector<1x128xf32> to vector<8x128xf32>
    %125 = arith.mulf %123, %124 : vector<8x128xf32>
    %126 = vector.broadcast %14 : vector<1x128xf32> to vector<8x128xf32>
    %127 = arith.addf %125, %126 : vector<8x128xf32>
    %128 = vector.extract_strided_slice %127 {offsets = [0, 0], sizes = [8, 32], strides = [1, 1]} : vector<8x128xf32> to vector<8x32xf32>
    %129 = vector.extract_strided_slice %127 {offsets = [0, 32], sizes = [8, 32], strides = [1, 1]} : vector<8x128xf32> to vector<8x32xf32>
    %130 = vector.extract_strided_slice %127 {offsets = [0, 64], sizes = [8, 32], strides = [1, 1]} : vector<8x128xf32> to vector<8x32xf32>
    %131 = vector.extract_strided_slice %127 {offsets = [0, 96], sizes = [8, 32], strides = [1, 1]} : vector<8x128xf32> to vector<8x32xf32>
    %132 = arith.mulf %129, %114 : vector<8x32xf32>
    %133 = arith.mulf %128, %130 : vector<8x32xf32>
    %134 = arith.addf %132, %133 : vector<8x32xf32>
    %135 = math.tanh %134 : vector<8x32xf32>
    %136 = arith.mulf %131, %135 : vector<8x32xf32>
    %c6 = arith.constant 6 : index
    %c0_29 = arith.constant 0 : index
    %c0_30 = arith.constant 0 : index
    %137 = vector.load %arg1[%c6, %c0_29, %c0_30] : memref<8x8x128xf32, #tpu.memory_space<vmem>>, vector<1x8x128xf32>
    %138 = vector.shape_cast %137 : vector<1x8x128xf32> to vector<8x128xf32>
    %cst_31 = arith.constant dense<0.000000e+00> : vector<8x128xf32>
    %139 = tpu.matmul %136, %0, %cst_31 {dimension_numbers = #tpu.dot_dimension_numbers<[1], [0], [0], [1], [0, 0, 1, 1], [], []>} : vector<8x32xf32>, vector<32x128xf32>, vector<8x128xf32> -> vector<8x128xf32>
    %140 = arith.addf %138, %139 : vector<8x128xf32>
    %141 = vector.broadcast %11 : vector<1x128xf32> to vector<8x128xf32>
    %142 = arith.mulf %140, %141 : vector<8x128xf32>
    %143 = math.tanh %142 : vector<8x128xf32>
    %144 = vector.broadcast %11 : vector<1x128xf32> to vector<8x128xf32>
    %145 = arith.mulf %143, %144 : vector<8x128xf32>
    %146 = vector.broadcast %14 : vector<1x128xf32> to vector<8x128xf32>
    %147 = arith.addf %145, %146 : vector<8x128xf32>
    %148 = vector.extract_strided_slice %147 {offsets = [0, 0], sizes = [8, 32], strides = [1, 1]} : vector<8x128xf32> to vector<8x32xf32>
    %149 = vector.extract_strided_slice %147 {offsets = [0, 32], sizes = [8, 32], strides = [1, 1]} : vector<8x128xf32> to vector<8x32xf32>
    %150 = vector.extract_strided_slice %147 {offsets = [0, 64], sizes = [8, 32], strides = [1, 1]} : vector<8x128xf32> to vector<8x32xf32>
    %151 = vector.extract_strided_slice %147 {offsets = [0, 96], sizes = [8, 32], strides = [1, 1]} : vector<8x128xf32> to vector<8x32xf32>
    %152 = arith.mulf %149, %134 : vector<8x32xf32>
    %153 = arith.mulf %148, %150 : vector<8x32xf32>
    %154 = arith.addf %152, %153 : vector<8x32xf32>
    %155 = math.tanh %154 : vector<8x32xf32>
    %156 = arith.mulf %151, %155 : vector<8x32xf32>
    %c7 = arith.constant 7 : index
    %c0_32 = arith.constant 0 : index
    %c0_33 = arith.constant 0 : index
    %157 = vector.load %arg1[%c7, %c0_32, %c0_33] : memref<8x8x128xf32, #tpu.memory_space<vmem>>, vector<1x8x128xf32>
    %158 = vector.shape_cast %157 : vector<1x8x128xf32> to vector<8x128xf32>
    %cst_34 = arith.constant dense<0.000000e+00> : vector<8x128xf32>
    %159 = tpu.matmul %156, %0, %cst_34 {dimension_numbers = #tpu.dot_dimension_numbers<[1], [0], [0], [1], [0, 0, 1, 1], [], []>} : vector<8x32xf32>, vector<32x128xf32>, vector<8x128xf32> -> vector<8x128xf32>
    %160 = arith.addf %158, %159 : vector<8x128xf32>
    %161 = vector.broadcast %11 : vector<1x128xf32> to vector<8x128xf32>
    %162 = arith.mulf %160, %161 : vector<8x128xf32>
    %163 = math.tanh %162 : vector<8x128xf32>
    %164 = vector.broadcast %11 : vector<1x128xf32> to vector<8x128xf32>
    %165 = arith.mulf %163, %164 : vector<8x128xf32>
    %166 = vector.broadcast %14 : vector<1x128xf32> to vector<8x128xf32>
    %167 = arith.addf %165, %166 : vector<8x128xf32>
    %168 = vector.extract_strided_slice %167 {offsets = [0, 0], sizes = [8, 32], strides = [1, 1]} : vector<8x128xf32> to vector<8x32xf32>
    %169 = vector.extract_strided_slice %167 {offsets = [0, 32], sizes = [8, 32], strides = [1, 1]} : vector<8x128xf32> to vector<8x32xf32>
    %170 = vector.extract_strided_slice %167 {offsets = [0, 64], sizes = [8, 32], strides = [1, 1]} : vector<8x128xf32> to vector<8x32xf32>
    %171 = vector.extract_strided_slice %167 {offsets = [0, 96], sizes = [8, 32], strides = [1, 1]} : vector<8x128xf32> to vector<8x32xf32>
    %172 = arith.mulf %169, %154 : vector<8x32xf32>
    %173 = arith.mulf %168, %170 : vector<8x32xf32>
    %174 = arith.addf %172, %173 : vector<8x32xf32>
    %175 = math.tanh %174 : vector<8x32xf32>
    %176 = arith.mulf %171, %175 : vector<8x32xf32>
    %177 = tpu.concatenate %116, %136, %156, %176 in 1 : vector<8x32xf32>, vector<8x32xf32>, vector<8x32xf32>, vector<8x32xf32> -> vector<8x128xf32>
    %c0_35 = arith.constant 0 : index
    %c128 = arith.constant 128 : index
    %178 = vector.load %arg5[%c0_35, %c128] : memref<8x256xf32, #tpu.memory_space<vmem>>, vector<8x128xf32>
    tpu.vector_store %arg5[%c0_35, %c128], %177 {strides = array<i32>} : memref<8x256xf32, #tpu.memory_space<vmem>>, vector<8x128xf32>,
    return
  }
  func.func @transform_0(%arg0: i32) -> (i32, i32, i32) {
    %c0_i32 = arith.constant 0 : i32
    %c0_i32_0 = arith.constant 0 : i32
    %c0_i32_1 = arith.constant 0 : i32
    return %c0_i32, %arg0, %c0_i32_0 : i32, i32, i32
  }
  func.func @transform_1(%arg0: i32) -> (i32, i32) {
    %c0_i32 = arith.constant 0 : i32
    %c0_i32_0 = arith.constant 0 : i32
    %c0_i32_1 = arith.constant 0 : i32
    return %c0_i32, %c0_i32_0 : i32, i32
  }
  func.func @transform_2(%arg0: i32) -> (i32, i32) {
    %c0_i32 = arith.constant 0 : i32
    %c0_i32_0 = arith.constant 0 : i32
    return %arg0, %c0_i32 : i32, i32
  }
  func.func @transform_3(%arg0: i32) -> (i32, i32) {
    %c0_i32 = arith.constant 0 : i32
    %c0_i32_0 = arith.constant 0 : i32
    return %arg0, %c0_i32 : i32, i32
  }
  func.func @transform_4(%arg0: i32) -> (i32, i32) {
    %c0_i32 = arith.constant 0 : i32
    %c0_i32_0 = arith.constant 0 : i32
    return %arg0, %c0_i32 : i32, i32
  }
}

</mosaic_0001>

<llo_original>
// kernel: tpu_custom_call.1
$region0: #{tpu_custom_call.1}
  #allocation0 [shape = 'u32[]', space=smem, size = 0x4, offset = 0x4, fixed_abs, tag = 'smem constant byte address 0x4 - core index']
  #allocation1 [shape = 'u32[144,128]{1,0:T(1,128)}', space=vmem, size = 0x12000, scoped, tag = 'internal scratch']
  %s0 = inlined_call_operand.hbm [shape: f32[8,8,128], index: 0, kind: input, shape index: {}]
  %s1 = inlined_call_operand.hbm [shape: f32[32,128], index: 1, kind: input, shape index: {}]
  %s2 = inlined_call_operand.hbm [shape: f32[8,32], index: 2, kind: input, shape index: {}]
  %s3 = inlined_call_operand.vmem [shape: f32[8,32], index: 3, kind: input, shape index: {}]
  %s4 = inlined_call_operand.hbm [shape: f32[8,256], index: 4, kind: output, shape index: {}]
  %s5 = sld [smem:[#allocation0]]
  $region38: #{tpu_custom_call.1} parent=0
    _
  %s7 = ssub.s32 1, %s5
  %s8 = scalar_select 0, %s7, %s5
  $region1: #{tpu_custom_call.1} parent=0
    #allocation2 [shape = 'u8[32768]{0}', space=vmem, size = 0x8000, scoped, tag = 'input window, operand 0, single buffered']
    #allocation3 [shape = 's32[1]{0}', space=sflag, size = 0x4, scoped, tag = 'scoped memory for tpu_custom_call.1']
    #allocation4 [shape = 's32[1]{0}', space=sflag, size = 0x4, scoped, tag = 'scoped memory for tpu_custom_call.1']
    #allocation5 [shape = 'u8[16384]{0}', space=vmem, size = 0x4000, scoped, tag = 'input window, operand 1, single buffered']
    #allocation6 [shape = 's32[1]{0}', space=sflag, size = 0x4, scoped, tag = 'scoped memory for tpu_custom_call.1']
    #allocation7 [shape = 'u8[4096]{0}', space=vmem, size = 0x1000, scoped, tag = 'input window, operand 2, single buffered']
    #allocation8 [shape = 'u8[8192]{0}', space=vmem, size = 0x2000, scoped, tag = 'output window, operand 0, single buffered']
    %9 = vsyncpa [#allocation3], 0
    %10 = vsyncpa [#allocation6], 0
    %11 = vsyncpa [#allocation4], 0
    // Predicated region
    $region2: #{tpu_custom_call.1} parent=1 // pred_check
      _
    $region3: #{tpu_custom_call.1} parent=1 // pred_check_branch
      %13 = sbr.rel (0) target = $region5
    $region4: #{tpu_custom_call.1} parent=1 // pred_region
      %s15 = ssub.s32 1024, 1024
      %16 = vsyncadd [#allocation3], %s15
      %s17 = sshll.u32 [#allocation2], 4
      %s18 = int_to_ptr.vmem [resolvable:$true] %s17
      %23 = dma.hbm_to_vmem [thread:$0]  %s0, 1024, %s18, [#allocation3], 128, 128, 8
    $region5: #{tpu_custom_call.1} parent=1 // pred_fallthru
      _
    // Predicated region
    $region6: #{tpu_custom_call.1} parent=1 // pred_check
      _
    $region7: #{tpu_custom_call.1} parent=1 // pred_check_branch
      %25 = sbr.rel (0) target = $region9
    $region8: #{tpu_custom_call.1} parent=1 // pred_region
      %s27 = ssub.s32 512, 512
      %28 = vsyncadd [#allocation6], %s27
      %s29 = sshll.u32 [#allocation5], 4
      %s30 = int_to_ptr.vmem [resolvable:$true] %s29
      %35 = dma.hbm_to_vmem [thread:$0]  %s1, 512, %s30, [#allocation6], 128, 128, 8
    $region9: #{tpu_custom_call.1} parent=1 // pred_fallthru
      _
    // Predicated region
    $region10: #{tpu_custom_call.1} parent=1 // pred_check
      _
    $region11: #{tpu_custom_call.1} parent=1 // pred_check_branch
      %37 = sbr.rel (0) target = $region13
    $region12: #{tpu_custom_call.1} parent=1 // pred_region
      %s39 = ssub.s32 128, 128
      %40 = vsyncadd [#allocation6], %s39
      %s42 = sshll.u32 [#allocation7], 4
      %s43 = int_to_ptr.vmem [resolvable:$true] %s42
      %45 = dma.hbm_to_vmem [thread:$0]  %s2, 128, %s43, [#allocation6]
    $region13: #{tpu_custom_call.1} parent=1 // pred_fallthru
      _
    // Predicated region
    $region14: #{tpu_custom_call.1} parent=1 // pred_check
      _
    $region15: #{tpu_custom_call.1} parent=1 // pred_check_branch
      %47 = sbr.rel (0) target = $region17
    $region16: #{tpu_custom_call.1} parent=1 // pred_region
      _
    $region17: #{tpu_custom_call.1} parent=1 // pred_fallthru
      _
    // Predicated region
    $region18: #{tpu_custom_call.1} parent=1 // pred_check
      _
    $region19: #{tpu_custom_call.1} parent=1 // pred_check_branch
      %49 = sbr.rel (0) target = $region21
    $region20: #{tpu_custom_call.1} parent=1 // pred_region
      %50 = dma.done [#allocation3], 1024
    $region21: #{tpu_custom_call.1} parent=1 // pred_fallthru
      _
    // Predicated region
    $region22: #{tpu_custom_call.1} parent=1 // pred_check
      _
    $region23: #{tpu_custom_call.1} parent=1 // pred_check_branch
      %52 = sbr.rel (0) target = $region25
    $region24: #{tpu_custom_call.1} parent=1 // pred_region
      %53 = dma.done [#allocation6], 512
    $region25: #{tpu_custom_call.1} parent=1 // pred_fallthru
      _
    // Predicated region
    $region26: #{tpu_custom_call.1} parent=1 // pred_check
      _
    $region27: #{tpu_custom_call.1} parent=1 // pred_check_branch
      %55 = sbr.rel (0) target = $region29
    $region28: #{tpu_custom_call.1} parent=1 // pred_region
      %56 = dma.done [#allocation6], 128
    $region29: #{tpu_custom_call.1} parent=1 // pred_fallthru
      _
    %v57 = vld [vmem:[#allocation5] sm:$0xff]
    %v58 = vld [vmem:[#allocation5 + $0x8] sm:$0xff]
    %v59 = vld [vmem:[#allocation5 + $0x10] sm:$0xff]
    %v60 = vld [vmem:[#allocation5 + $0x18] sm:$0xff]
    %v61 = vld [vmem:[#allocation7] sm:$0xff]
    %v62 = vld [vmem:[%s3] sm:$0xff]
    %v63 = vlaneseq
    %v64 = vand.u32 %v63, 127
    %vm65 = vcmp.ge.s32.totalorder %v64, 64
    %vm66 = vcmp.lt.s32.totalorder %v64, 96
    %vm67 = vmand %vm65, %vm66
    %v68 = vsel %vm67, 1.0, 0.5
    %v69 = vsel %vm67, 0.0, 0.5
    %v70 = vld [vmem:[#allocation2] sm:$0xff]
    %vm71 = vcmask 261120
    %v73 = vsel %vm71, %v61, 0
    %75 = vmatprep.subr.mxu0 0.0
    %76 = vmatpush1.msra.mxu0 %v57
    %77 = vmatprep.subr.mxu0 0.0
    %78 = vmatpush1.msra.mxu0 %v58
    %79 = vmatprep.subr.mxu0 0.0
    %80 = vmatpush1.msra.mxu0 %v59
    %81 = vmatprep.subr.mxu0 0.0
    %82 = vmatpush1.msra.mxu0 %v60
    %83 = vmatprep.subr.mxu0 0.0
    %84 = vmatpush1.msra.mxu0 0.0
    %85 = vmatprep.subr.mxu0 0.0
    %86 = vmatpush1.msra.mxu0 0.0
    %87 = vmatprep.subr.mxu0 0.0
    %88 = vmatpush1.msra.mxu0 0.0
    %89 = vmatprep.subr.mxu0 0.0
    %90 = vmatpush1.msra.mxu0 0.0
    %91 = vmatprep.subr.mxu0 0.0
    %92 = vmatpush1.msra.mxu0 0.0
    %93 = vmatprep.subr.mxu0 0.0
    %94 = vmatpush1.msra.mxu0 0.0
    %95 = vmatprep.subr.mxu0 0.0
    %96 = vmatpush1.msra.mxu0 0.0
    %97 = vmatprep.subr.mxu0 0.0
    %98 = vmatpush1.msra.mxu0 0.0
    %99 = vmatprep.subr.mxu0 0.0
    %100 = vmatpush1.msra.mxu0 0.0
    %101 = vmatprep.subr.mxu0 0.0
    %102 = vmatpush1.msra.mxu0 0.0
    %103 = vmatprep.subr.mxu0 0.0
    %104 = vmatpush1.msra.mxu0 0.0
    %105 = vmatprep.subr.mxu0 0.0
    %106 = vmatpush1.msra.mxu0 0.0
    %107 = vmatprep.subr.mxu0 0.0
    %108 = vmatpush1.msra.mxu0 0.0
    %109 = vmatprep.subr.mxu0 0.0
    %110 = vmatpush1.msra.mxu0 0.0
    %111 = vmatprep.subr.mxu0 0.0
    %112 = vmatpush1.msra.mxu0 0.0
    %113 = vmatprep.subr.mxu0 0.0
    %114 = vmatpush1.msra.mxu0 0.0
    %115 = vmatprep.subr.mxu0 0.0
    %116 = vmatpush1.msra.mxu0 0.0
    %117 = vmatprep.subr.mxu0 0.0
    %118 = vmatpush1.msra.mxu0 0.0
    %119 = vmatprep.subr.mxu0 0.0
    %120 = vmatpush1.msra.mxu0 0.0
    %121 = vmatprep.subr.mxu0 0.0
    %122 = vmatpush1.msra.mxu0 0.0
    %123 = vmatprep.subr.mxu0 0.0
    %124 = vmatpush1.msra.mxu0 0.0
    %125 = vmatprep.subr.mxu0 0.0
    %126 = vmatpush1.msra.mxu0 0.0
    %127 = vmatprep.subr.mxu0 0.0
    %128 = vmatpush1.msra.mxu0 0.0
    %129 = vmatprep.subr.mxu0 0.0
    %130 = vmatpush1.msra.mxu0 0.0
    %131 = vmatprep.subr.mxu0 0.0
    %132 = vmatpush1.msra.mxu0 0.0
    %133 = vmatprep.subr.mxu0 0.0
    %134 = vmatpush1.msra.mxu0 0.0
    %135 = vmatprep.subr.mxu0 0.0
    %136 = vmatpush1.msra.mxu0 0.0
    %137 = vmatprep.subr.mxu0 0.0
    %138 = vmatpush1.msra.mxu0 0.0
    %139 = vmatprep.mubr.f32.mxu0 0.0
    %140 = vmatmul.mubr.f32.gmra.mrb[0].mxu0 %v73
    %v141 = vpop.f32.mrb[0].mxu0
    %v142 = vadd.f32 0.0, %v141
    %v143 = vpop.f32.mrb[0].mxu0
    %144 = vdwg.mxu0
    %v145 = vadd.f32 %v70, %v142
    %v146 = vmul.f32 %v145, %v68
    %v147 = vtanh.pop %v146
    %v148 = vmul.f32 %v147, %v68
    %v149 = vadd.f32 %v148, %v69
    %151 = vrot.lane.b32.xlu0 %v62, 32
    %v152 = vpop.permute.xlu0 %151
    %v154 = vmul.f32 %v149, %v152
    %156 = vrot.lane.b32.xlu0 %v149, 64
    %v157 = vpop.permute.xlu0 %156
    %v159 = vmul.f32 %v149, %v157
    %161 = vrot.lane.b32.xlu0 %v159, 32
    %v162 = vpop.permute.xlu0 %161
    %v164 = vadd.f32 %v154, %v162
    %v165 = vtanh.pop %v164
    %167 = vrot.lane.b32.xlu0 %v165, 64
    %v168 = vpop.permute.xlu0 %167
    %v170 = vmul.f32 %v149, %v168
    %s171 = scalar_lea.vmem [#allocation2], 8
    %v172 = vld [vmem:[%s171] sm:$0xff]
    %174 = vrot.lane.b32.xlu0 %v170, 32
    %v175 = vpop.permute.xlu0 %174
    %v176 = vsel %vm71, %v175, 0
    %178 = vmatprep.subr.mxu0 0.0
    %179 = vmatpush1.msra.mxu0 %v57
    %180 = vmatprep.subr.mxu0 0.0
    %181 = vmatpush1.msra.mxu0 %v58
    %182 = vmatprep.subr.mxu0 0.0
    %183 = vmatpush1.msra.mxu0 %v59
    %184 = vmatprep.subr.mxu0 0.0
    %185 = vmatpush1.msra.mxu0 %v60
    %186 = vmatprep.subr.mxu0 0.0
    %187 = vmatpush1.msra.mxu0 0.0
    %188 = vmatprep.subr.mxu0 0.0
    %189 = vmatpush1.msra.mxu0 0.0
    %190 = vmatprep.subr.mxu0 0.0
    %191 = vmatpush1.msra.mxu0 0.0
    %192 = vmatprep.subr.mxu0 0.0
    %193 = vmatpush1.msra.mxu0 0.0
    %194 = vmatprep.subr.mxu0 0.0
    %195 = vmatpush1.msra.mxu0 0.0
    %196 = vmatprep.subr.mxu0 0.0
    %197 = vmatpush1.msra.mxu0 0.0
    %198 = vmatprep.subr.mxu0 0.0
    %199 = vmatpush1.msra.mxu0 0.0
    %200 = vmatprep.subr.mxu0 0.0
    %201 = vmatpush1.msra.mxu0 0.0
    %202 = vmatprep.subr.mxu0 0.0
    %203 = vmatpush1.msra.mxu0 0.0
    %204 = vmatprep.subr.mxu0 0.0
    %205 = vmatpush1.msra.mxu0 0.0
    %206 = vmatprep.subr.mxu0 0.0
    %207 = vmatpush1.msra.mxu0 0.0
    %208 = vmatprep.subr.mxu0 0.0
    %209 = vmatpush1.msra.mxu0 0.0
    %210 = vmatprep.subr.mxu0 0.0
    %211 = vmatpush1.msra.mxu0 0.0
    %212 = vmatprep.subr.mxu0 0.0
    %213 = vmatpush1.msra.mxu0 0.0
    %214 = vmatprep.subr.mxu0 0.0
    %215 = vmatpush1.msra.mxu0 0.0
    %216 = vmatprep.subr.mxu0 0.0
    %217 = vmatpush1.msra.mxu0 0.0
    %218 = vmatprep.subr.mxu0 0.0
    %219 = vmatpush1.msra.mxu0 0.0
    %220 = vmatprep.subr.mxu0 0.0
    %221 = vmatpush1.msra.mxu0 0.0
    %222 = vmatprep.subr.mxu0 0.0
    %223 = vmatpush1.msra.mxu0 0.0
    %224 = vmatprep.subr.mxu0 0.0
    %225 = vmatpush1.msra.mxu0 0.0
    %226 = vmatprep.subr.mxu0 0.0
    %227 = vmatpush1.msra.mxu0 0.0
    %228 = vmatprep.subr.mxu0 0.0
    %229 = vmatpush1.msra.mxu0 0.0
    %230 = vmatprep.subr.mxu0 0.0
    %231 = vmatpush1.msra.mxu0 0.0
    %232 = vmatprep.subr.mxu0 0.0
    %233 = vmatpush1.msra.mxu0 0.0
    %234 = vmatprep.subr.mxu0 0.0
    %235 = vmatpush1.msra.mxu0 0.0
    %236 = vmatprep.subr.mxu0 0.0
    %237 = vmatpush1.msra.mxu0 0.0
    %238 = vmatprep.subr.mxu0 0.0
    %239 = vmatpush1.msra.mxu0 0.0
    %240 = vmatprep.subr.mxu0 0.0
    %241 = vmatpush1.msra.mxu0 0.0
    %242 = vmatprep.mubr.f32.mxu0 0.0
    %243 = vmatmul.mubr.f32.gmra.mrb[0].mxu0 %v176
    %v244 = vpop.f32.mrb[0].mxu0
    %v245 = vadd.f32 0.0, %v244
    %v246 = vpop.f32.mrb[0].mxu0
    %247 = vdwg.mxu0
    %v248 = vadd.f32 %v172, %v245
    %v249 = vmul.f32 %v248, %v68
    %v250 = vtanh.pop %v249
    %v251 = vmul.f32 %v250, %v68
    %v252 = vadd.f32 %v251, %v69
    %v253 = vmul.f32 %v252, %v164
    %255 = vrot.lane.b32.xlu0 %v252, 64
    %v256 = vpop.permute.xlu0 %255
    %v258 = vmul.f32 %v252, %v256
    %260 = vrot.lane.b32.xlu0 %v258, 32
    %v261 = vpop.permute.xlu0 %260
    %v263 = vadd.f32 %v253, %v261
    %v264 = vtanh.pop %v263
    %266 = vrot.lane.b32.xlu0 %v264, 64
    %v267 = vpop.permute.xlu0 %266
    %v269 = vmul.f32 %v252, %v267
    %s270 = scalar_lea.vmem [#allocation2], 16
    %v271 = vld [vmem:[%s270] sm:$0xff]
    %273 = vrot.lane.b32.xlu0 %v269, 32
    %v274 = vpop.permute.xlu0 %273
    %v275 = vsel %vm71, %v274, 0
    %277 = vmatprep.subr.mxu0 0.0
    %278 = vmatpush1.msra.mxu0 %v57
    %279 = vmatprep.subr.mxu0 0.0
    %280 = vmatpush1.msra.mxu0 %v58
    %281 = vmatprep.subr.mxu0 0.0
    %282 = vmatpush1.msra.mxu0 %v59
    %283 = vmatprep.subr.mxu0 0.0
    %284 = vmatpush1.msra.mxu0 %v60
    %285 = vmatprep.subr.mxu0 0.0
    %286 = vmatpush1.msra.mxu0 0.0
    %287 = vmatprep.subr.mxu0 0.0
    %288 = vmatpush1.msra.mxu0 0.0
    %289 = vmatprep.subr.mxu0 0.0
    %290 = vmatpush1.msra.mxu0 0.0
    %291 = vmatprep.subr.mxu0 0.0
    %292 = vmatpush1.msra.mxu0 0.0
    %293 = vmatprep.subr.mxu0 0.0
    %294 = vmatpush1.msra.mxu0 0.0
    %295 = vmatprep.subr.mxu0 0.0
    %296 = vmatpush1.msra.mxu0 0.0
    %297 = vmatprep.subr.mxu0 0.0
    %298 = vmatpush1.msra.mxu0 0.0
    %299 = vmatprep.subr.mxu0 0.0
    %300 = vmatpush1.msra.mxu0 0.0
    %301 = vmatprep.subr.mxu0 0.0
    %302 = vmatpush1.msra.mxu0 0.0
    %303 = vmatprep.subr.mxu0 0.0
    %304 = vmatpush1.msra.mxu0 0.0
    %305 = vmatprep.subr.mxu0 0.0
    %306 = vmatpush1.msra.mxu0 0.0
    %307 = vmatprep.subr.mxu0 0.0
    %308 = vmatpush1.msra.mxu0 0.0
    %309 = vmatprep.subr.mxu0 0.0
    %310 = vmatpush1.msra.mxu0 0.0
    %311 = vmatprep.subr.mxu0 0.0
    %312 = vmatpush1.msra.mxu0 0.0
    %313 = vmatprep.subr.mxu0 0.0
    %314 = vmatpush1.msra.mxu0 0.0
    %315 = vmatprep.subr.mxu0 0.0
    %316 = vmatpush1.msra.mxu0 0.0
    %317 = vmatprep.subr.mxu0 0.0
    %318 = vmatpush1.msra.mxu0 0.0
    %319 = vmatprep.subr.mxu0 0.0
    %320 = vmatpush1.msra.mxu0 0.0
    %321 = vmatprep.subr.mxu0 0.0
    %322 = vmatpush1.msra.mxu0 0.0
    %323 = vmatprep.subr.mxu0 0.0
    %324 = vmatpush1.msra.mxu0 0.0
    %325 = vmatprep.subr.mxu0 0.0
    %326 = vmatpush1.msra.mxu0 0.0
    %327 = vmatprep.subr.mxu0 0.0
    %328 = vmatpush1.msra.mxu0 0.0
    %329 = vmatprep.subr.mxu0 0.0
    %330 = vmatpush1.msra.mxu0 0.0
    %331 = vmatprep.subr.mxu0 0.0
    %332 = vmatpush1.msra.mxu0 0.0
    %333 = vmatprep.subr.mxu0 0.0
    %334 = vmatpush1.msra.mxu0 0.0
    %335 = vmatprep.subr.mxu0 0.0
    %336 = vmatpush1.msra.mxu0 0.0
    %337 = vmatprep.subr.mxu0 0.0
    %338 = vmatpush1.msra.mxu0 0.0
    %339 = vmatprep.subr.mxu0 0.0
    %340 = vmatpush1.msra.mxu0 0.0
    %341 = vmatprep.mubr.f32.mxu0 0.0
    %342 = vmatmul.mubr.f32.gmra.mrb[0].mxu0 %v275
    %v343 = vpop.f32.mrb[0].mxu0
    %v344 = vadd.f32 0.0, %v343
    %v345 = vpop.f32.mrb[0].mxu0
    %346 = vdwg.mxu0
    %v347 = vadd.f32 %v271, %v344
    %v348 = vmul.f32 %v347, %v68
    %v349 = vtanh.pop %v348
    %v350 = vmul.f32 %v349, %v68
    %v351 = vadd.f32 %v350, %v69
    %v352 = vmul.f32 %v351, %v263
    %354 = vrot.lane.b32.xlu0 %v351, 64
    %v355 = vpop.permute.xlu0 %354
    %v357 = vmul.f32 %v351, %v355
    %359 = vrot.lane.b32.xlu0 %v357, 32
    %v360 = vpop.permute.xlu0 %359
    %v362 = vadd.f32 %v352, %v360
    %v363 = vtanh.pop %v362
    %365 = vrot.lane.b32.xlu0 %v363, 64
    %v366 = vpop.permute.xlu0 %365
    %v368 = vmul.f32 %v351, %v366
    %s369 = scalar_lea.vmem [#allocation2], 24
    %v370 = vld [vmem:[%s369] sm:$0xff]
    %372 = vrot.lane.b32.xlu0 %v368, 32
    %v373 = vpop.permute.xlu0 %372
    %v374 = vsel %vm71, %v373, 0
    %376 = vmatprep.subr.mxu0 0.0
    %377 = vmatpush1.msra.mxu0 %v57
    %378 = vmatprep.subr.mxu0 0.0
    %379 = vmatpush1.msra.mxu0 %v58
    %380 = vmatprep.subr.mxu0 0.0
    %381 = vmatpush1.msra.mxu0 %v59
    %382 = vmatprep.subr.mxu0 0.0
    %383 = vmatpush1.msra.mxu0 %v60
    %384 = vmatprep.subr.mxu0 0.0
    %385 = vmatpush1.msra.mxu0 0.0
    %386 = vmatprep.subr.mxu0 0.0
    %387 = vmatpush1.msra.mxu0 0.0
    %388 = vmatprep.subr.mxu0 0.0
    %389 = vmatpush1.msra.mxu0 0.0
    %390 = vmatprep.subr.mxu0 0.0
    %391 = vmatpush1.msra.mxu0 0.0
    %392 = vmatprep.subr.mxu0 0.0
    %393 = vmatpush1.msra.mxu0 0.0
    %394 = vmatprep.subr.mxu0 0.0
    %395 = vmatpush1.msra.mxu0 0.0
    %396 = vmatprep.subr.mxu0 0.0
    %397 = vmatpush1.msra.mxu0 0.0
    %398 = vmatprep.subr.mxu0 0.0
    %399 = vmatpush1.msra.mxu0 0.0
    %400 = vmatprep.subr.mxu0 0.0
    %401 = vmatpush1.msra.mxu0 0.0
    %402 = vmatprep.subr.mxu0 0.0
    %403 = vmatpush1.msra.mxu0 0.0
    %404 = vmatprep.subr.mxu0 0.0
    %405 = vmatpush1.msra.mxu0 0.0
    %406 = vmatprep.subr.mxu0 0.0
    %407 = vmatpush1.msra.mxu0 0.0
    %408 = vmatprep.subr.mxu0 0.0
    %409 = vmatpush1.msra.mxu0 0.0
    %410 = vmatprep.subr.mxu0 0.0
    %411 = vmatpush1.msra.mxu0 0.0
    %412 = vmatprep.subr.mxu0 0.0
    %413 = vmatpush1.msra.mxu0 0.0
    %414 = vmatprep.subr.mxu0 0.0
    %415 = vmatpush1.msra.mxu0 0.0
    %416 = vmatprep.subr.mxu0 0.0
    %417 = vmatpush1.msra.mxu0 0.0
    %418 = vmatprep.subr.mxu0 0.0
    %419 = vmatpush1.msra.mxu0 0.0
    %420 = vmatprep.subr.mxu0 0.0
    %421 = vmatpush1.msra.mxu0 0.0
    %422 = vmatprep.subr.mxu0 0.0
    %423 = vmatpush1.msra.mxu0 0.0
    %424 = vmatprep.subr.mxu0 0.0
    %425 = vmatpush1.msra.mxu0 0.0
    %426 = vmatprep.subr.mxu0 0.0
    %427 = vmatpush1.msra.mxu0 0.0
    %428 = vmatprep.subr.mxu0 0.0
    %429 = vmatpush1.msra.mxu0 0.0
    %430 = vmatprep.subr.mxu0 0.0
    %431 = vmatpush1.msra.mxu0 0.0
    %432 = vmatprep.subr.mxu0 0.0
    %433 = vmatpush1.msra.mxu0 0.0
    %434 = vmatprep.subr.mxu0 0.0
    %435 = vmatpush1.msra.mxu0 0.0
    %436 = vmatprep.subr.mxu0 0.0
    %437 = vmatpush1.msra.mxu0 0.0
    %438 = vmatprep.subr.mxu0 0.0
    %439 = vmatpush1.msra.mxu0 0.0
    %440 = vmatprep.mubr.f32.mxu0 0.0
    %441 = vmatmul.mubr.f32.gmra.mrb[0].mxu0 %v374
    %v442 = vpop.f32.mrb[0].mxu0
    %v443 = vadd.f32 0.0, %v442
    %v444 = vpop.f32.mrb[0].mxu0
    %445 = vdwg.mxu0
    %v446 = vadd.f32 %v370, %v443
    %v447 = vmul.f32 %v446, %v68
    %v448 = vtanh.pop %v447
    %v449 = vmul.f32 %v448, %v68
    %v450 = vadd.f32 %v449, %v69
    %v451 = vmul.f32 %v450, %v362
    %453 = vrot.lane.b32.xlu0 %v450, 64
    %v454 = vpop.permute.xlu0 %453
    %v456 = vmul.f32 %v450, %v454
    %458 = vrot.lane.b32.xlu0 %v456, 32
    %v459 = vpop.permute.xlu0 %458
    %v461 = vadd.f32 %v451, %v459
    %v462 = vtanh.pop %v461
    %464 = vrot.lane.b32.xlu0 %v462, 64
    %v465 = vpop.permute.xlu0 %464
    %v467 = vmul.f32 %v450, %v465
    %469 = vrot.lane.b32.xlu0 %v269, 64
    %v470 = vpop.permute.xlu0 %469
    %472 = vrot.lane.b32.xlu0 %v368, 96
    %v473 = vpop.permute.xlu0 %472
    %v475 = vsel %vm71, %v175, %v470
    %vm476 = vcmask 523264
    %v477 = vsel %vm476, %v475, %v473
    %vm478 = vcmask 785408
    %v479 = vsel %vm478, %v477, %v467
    %480 = vst [vmem:[#allocation8] sm:$0xff] %v479
    %s481 = scalar_lea.vmem [#allocation2], 32
    %v482 = vld [vmem:[%s481] sm:$0xff]
    %484 = vrot.lane.b32.xlu0 %v467, 32
    %v485 = vpop.permute.xlu0 %484
    %v486 = vsel %vm71, %v485, 0
    %488 = vmatprep.subr.mxu0 0.0
    %489 = vmatpush1.msra.mxu0 %v57
    %490 = vmatprep.subr.mxu0 0.0
    %491 = vmatpush1.msra.mxu0 %v58
    %492 = vmatprep.subr.mxu0 0.0
    %493 = vmatpush1.msra.mxu0 %v59
    %494 = vmatprep.subr.mxu0 0.0
    %495 = vmatpush1.msra.mxu0 %v60
    %496 = vmatprep.subr.mxu0 0.0
    %497 = vmatpush1.msra.mxu0 0.0
    %498 = vmatprep.subr.mxu0 0.0
    %499 = vmatpush1.msra.mxu0 0.0
    %500 = vmatprep.subr.mxu0 0.0
    %501 = vmatpush1.msra.mxu0 0.0
    %502 = vmatprep.subr.mxu0 0.0
    %503 = vmatpush1.msra.mxu0 0.0
    %504 = vmatprep.subr.mxu0 0.0
    %505 = vmatpush1.msra.mxu0 0.0
    %506 = vmatprep.subr.mxu0 0.0
    %507 = vmatpush1.msra.mxu0 0.0
    %508 = vmatprep.subr.mxu0 0.0
    %509 = vmatpush1.msra.mxu0 0.0
    %510 = vmatprep.subr.mxu0 0.0
    %511 = vmatpush1.msra.mxu0 0.0
    %512 = vmatprep.subr.mxu0 0.0
    %513 = vmatpush1.msra.mxu0 0.0
    %514 = vmatprep.subr.mxu0 0.0
    %515 = vmatpush1.msra.mxu0 0.0
    %516 = vmatprep.subr.mxu0 0.0
    %517 = vmatpush1.msra.mxu0 0.0
    %518 = vmatprep.subr.mxu0 0.0
    %519 = vmatpush1.msra.mxu0 0.0
    %520 = vmatprep.subr.mxu0 0.0
    %521 = vmatpush1.msra.mxu0 0.0
    %522 = vmatprep.subr.mxu0 0.0
    %523 = vmatpush1.msra.mxu0 0.0
    %524 = vmatprep.subr.mxu0 0.0
    %525 = vmatpush1.msra.mxu0 0.0
    %526 = vmatprep.subr.mxu0 0.0
    %527 = vmatpush1.msra.mxu0 0.0
    %528 = vmatprep.subr.mxu0 0.0
    %529 = vmatpush1.msra.mxu0 0.0
    %530 = vmatprep.subr.mxu0 0.0
    %531 = vmatpush1.msra.mxu0 0.0
    %532 = vmatprep.subr.mxu0 0.0
    %533 = vmatpush1.msra.mxu0 0.0
    %534 = vmatprep.subr.mxu0 0.0
    %535 = vmatpush1.msra.mxu0 0.0
    %536 = vmatprep.subr.mxu0 0.0
    %537 = vmatpush1.msra.mxu0 0.0
    %538 = vmatprep.subr.mxu0 0.0
    %539 = vmatpush1.msra.mxu0 0.0
    %540 = vmatprep.subr.mxu0 0.0
    %541 = vmatpush1.msra.mxu0 0.0
    %542 = vmatprep.subr.mxu0 0.0
    %543 = vmatpush1.msra.mxu0 0.0
    %544 = vmatprep.subr.mxu0 0.0
    %545 = vmatpush1.msra.mxu0 0.0
    %546 = vmatprep.subr.mxu0 0.0
    %547 = vmatpush1.msra.mxu0 0.0
    %548 = vmatprep.subr.mxu0 0.0
    %549 = vmatpush1.msra.mxu0 0.0
    %550 = vmatprep.subr.mxu0 0.0
    %551 = vmatpush1.msra.mxu0 0.0
    %552 = vmatprep.mubr.f32.mxu0 0.0
    %553 = vmatmul.mubr.f32.gmra.mrb[0].mxu0 %v486
    %v554 = vpop.f32.mrb[0].mxu0
    %v555 = vadd.f32 0.0, %v554
    %v556 = vpop.f32.mrb[0].mxu0
    %557 = vdwg.mxu0
    %v558 = vadd.f32 %v482, %v555
    %v559 = vmul.f32 %v558, %v68
    %v560 = vtanh.pop %v559
    %v561 = vmul.f32 %v560, %v68
    %v562 = vadd.f32 %v561, %v69
    %v563 = vmul.f32 %v562, %v461
    %565 = vrot.lane.b32.xlu0 %v562, 64
    %v566 = vpop.permute.xlu0 %565
    %v568 = vmul.f32 %v562, %v566
    %570 = vrot.lane.b32.xlu0 %v568, 32
    %v571 = vpop.permute.xlu0 %570
    %v573 = vadd.f32 %v563, %v571
    %v574 = vtanh.pop %v573
    %576 = vrot.lane.b32.xlu0 %v574, 64
    %v577 = vpop.permute.xlu0 %576
    %v579 = vmul.f32 %v562, %v577
    %s580 = scalar_lea.vmem [#allocation2], 40
    %v581 = vld [vmem:[%s580] sm:$0xff]
    %583 = vrot.lane.b32.xlu0 %v579, 32
    %v584 = vpop.permute.xlu0 %583
    %v585 = vsel %vm71, %v584, 0
    %587 = vmatprep.subr.mxu0 0.0
    %588 = vmatpush1.msra.mxu0 %v57
    %589 = vmatprep.subr.mxu0 0.0
    %590 = vmatpush1.msra.mxu0 %v58
    %591 = vmatprep.subr.mxu0 0.0
    %592 = vmatpush1.msra.mxu0 %v59
    %593 = vmatprep.subr.mxu0 0.0
    %594 = vmatpush1.msra.mxu0 %v60
    %595 = vmatprep.subr.mxu0 0.0
    %596 = vmatpush1.msra.mxu0 0.0
    %597 = vmatprep.subr.mxu0 0.0
    %598 = vmatpush1.msra.mxu0 0.0
    %599 = vmatprep.subr.mxu0 0.0
    %600 = vmatpush1.msra.mxu0 0.0
    %601 = vmatprep.subr.mxu0 0.0
    %602 = vmatpush1.msra.mxu0 0.0
    %603 = vmatprep.subr.mxu0 0.0
    %604 = vmatpush1.msra.mxu0 0.0
    %605 = vmatprep.subr.mxu0 0.0
    %606 = vmatpush1.msra.mxu0 0.0
    %607 = vmatprep.subr.mxu0 0.0
    %608 = vmatpush1.msra.mxu0 0.0
    %609 = vmatprep.subr.mxu0 0.0
    %610 = vmatpush1.msra.mxu0 0.0
    %611 = vmatprep.subr.mxu0 0.0
    %612 = vmatpush1.msra.mxu0 0.0
    %613 = vmatprep.subr.mxu0 0.0
    %614 = vmatpush1.msra.mxu0 0.0
    %615 = vmatprep.subr.mxu0 0.0
    %616 = vmatpush1.msra.mxu0 0.0
    %617 = vmatprep.subr.mxu0 0.0
    %618 = vmatpush1.msra.mxu0 0.0
    %619 = vmatprep.subr.mxu0 0.0
    %620 = vmatpush1.msra.mxu0 0.0
    %621 = vmatprep.subr.mxu0 0.0
    %622 = vmatpush1.msra.mxu0 0.0
    %623 = vmatprep.subr.mxu0 0.0
    %624 = vmatpush1.msra.mxu0 0.0
    %625 = vmatprep.subr.mxu0 0.0
    %626 = vmatpush1.msra.mxu0 0.0
    %627 = vmatprep.subr.mxu0 0.0
    %628 = vmatpush1.msra.mxu0 0.0
    %629 = vmatprep.subr.mxu0 0.0
    %630 = vmatpush1.msra.mxu0 0.0
    %631 = vmatprep.subr.mxu0 0.0
    %632 = vmatpush1.msra.mxu0 0.0
    %633 = vmatprep.subr.mxu0 0.0
    %634 = vmatpush1.msra.mxu0 0.0
    %635 = vmatprep.subr.mxu0 0.0
    %636 = vmatpush1.msra.mxu0 0.0
    %637 = vmatprep.subr.mxu0 0.0
    %638 = vmatpush1.msra.mxu0 0.0
    %639 = vmatprep.subr.mxu0 0.0
    %640 = vmatpush1.msra.mxu0 0.0
    %641 = vmatprep.subr.mxu0 0.0
    %642 = vmatpush1.msra.mxu0 0.0
    %643 = vmatprep.subr.mxu0 0.0
    %644 = vmatpush1.msra.mxu0 0.0
    %645 = vmatprep.subr.mxu0 0.0
    %646 = vmatpush1.msra.mxu0 0.0
    %647 = vmatprep.subr.mxu0 0.0
    %648 = vmatpush1.msra.mxu0 0.0
    %649 = vmatprep.subr.mxu0 0.0
    %650 = vmatpush1.msra.mxu0 0.0
    %651 = vmatprep.mubr.f32.mxu0 0.0
    %652 = vmatmul.mubr.f32.gmra.mrb[0].mxu0 %v585
    %v653 = vpop.f32.mrb[0].mxu0
    %v654 = vadd.f32 0.0, %v653
    %v655 = vpop.f32.mrb[0].mxu0
    %656 = vdwg.mxu0
    %v657 = vadd.f32 %v581, %v654
    %v658 = vmul.f32 %v657, %v68
    %v659 = vtanh.pop %v658
    %v660 = vmul.f32 %v659, %v68
    %v661 = vadd.f32 %v660, %v69
    %v662 = vmul.f32 %v661, %v573
    %664 = vrot.lane.b32.xlu0 %v661, 64
    %v665 = vpop.permute.xlu0 %664
    %v667 = vmul.f32 %v661, %v665
    %669 = vrot.lane.b32.xlu0 %v667, 32
    %v670 = vpop.permute.xlu0 %669
    %v672 = vadd.f32 %v662, %v670
    %v673 = vtanh.pop %v672
    %675 = vrot.lane.b32.xlu0 %v673, 64
    %v676 = vpop.permute.xlu0 %675
    %v678 = vmul.f32 %v661, %v676
    %s679 = scalar_lea.vmem [#allocation2], 48
    %v680 = vld [vmem:[%s679] sm:$0xff]
    %682 = vrot.lane.b32.xlu0 %v678, 32
    %v683 = vpop.permute.xlu0 %682
    %v684 = vsel %vm71, %v683, 0
    %686 = vmatprep.subr.mxu0 0.0
    %687 = vmatpush1.msra.mxu0 %v57
    %688 = vmatprep.subr.mxu0 0.0
    %689 = vmatpush1.msra.mxu0 %v58
    %690 = vmatprep.subr.mxu0 0.0
    %691 = vmatpush1.msra.mxu0 %v59
    %692 = vmatprep.subr.mxu0 0.0
    %693 = vmatpush1.msra.mxu0 %v60
    %694 = vmatprep.subr.mxu0 0.0
    %695 = vmatpush1.msra.mxu0 0.0
    %696 = vmatprep.subr.mxu0 0.0
    %697 = vmatpush1.msra.mxu0 0.0
    %698 = vmatprep.subr.mxu0 0.0
    %699 = vmatpush1.msra.mxu0 0.0
    %700 = vmatprep.subr.mxu0 0.0
    %701 = vmatpush1.msra.mxu0 0.0
    %702 = vmatprep.subr.mxu0 0.0
    %703 = vmatpush1.msra.mxu0 0.0
    %704 = vmatprep.subr.mxu0 0.0
    %705 = vmatpush1.msra.mxu0 0.0
    %706 = vmatprep.subr.mxu0 0.0
    %707 = vmatpush1.msra.mxu0 0.0
    %708 = vmatprep.subr.mxu0 0.0
    %709 = vmatpush1.msra.mxu0 0.0
    %710 = vmatprep.subr.mxu0 0.0
    %711 = vmatpush1.msra.mxu0 0.0
    %712 = vmatprep.subr.mxu0 0.0
    %713 = vmatpush1.msra.mxu0 0.0
    %714 = vmatprep.subr.mxu0 0.0
    %715 = vmatpush1.msra.mxu0 0.0
    %716 = vmatprep.subr.mxu0 0.0
    %717 = vmatpush1.msra.mxu0 0.0
    %718 = vmatprep.subr.mxu0 0.0
    %719 = vmatpush1.msra.mxu0 0.0
    %720 = vmatprep.subr.mxu0 0.0
    %721 = vmatpush1.msra.mxu0 0.0
    %722 = vmatprep.subr.mxu0 0.0
    %723 = vmatpush1.msra.mxu0 0.0
    %724 = vmatprep.subr.mxu0 0.0
    %725 = vmatpush1.msra.mxu0 0.0
    %726 = vmatprep.subr.mxu0 0.0
    %727 = vmatpush1.msra.mxu0 0.0
    %728 = vmatprep.subr.mxu0 0.0
    %729 = vmatpush1.msra.mxu0 0.0
    %730 = vmatprep.subr.mxu0 0.0
    %731 = vmatpush1.msra.mxu0 0.0
    %732 = vmatprep.subr.mxu0 0.0
    %733 = vmatpush1.msra.mxu0 0.0
    %734 = vmatprep.subr.mxu0 0.0
    %735 = vmatpush1.msra.mxu0 0.0
    %736 = vmatprep.subr.mxu0 0.0
    %737 = vmatpush1.msra.mxu0 0.0
    %738 = vmatprep.subr.mxu0 0.0
    %739 = vmatpush1.msra.mxu0 0.0
    %740 = vmatprep.subr.mxu0 0.0
    %741 = vmatpush1.msra.mxu0 0.0
    %742 = vmatprep.subr.mxu0 0.0
    %743 = vmatpush1.msra.mxu0 0.0
    %744 = vmatprep.subr.mxu0 0.0
    %745 = vmatpush1.msra.mxu0 0.0
    %746 = vmatprep.subr.mxu0 0.0
    %747 = vmatpush1.msra.mxu0 0.0
    %748 = vmatprep.subr.mxu0 0.0
    %749 = vmatpush1.msra.mxu0 0.0
    %750 = vmatprep.mubr.f32.mxu0 0.0
    %751 = vmatmul.mubr.f32.gmra.mrb[0].mxu0 %v684
    %v752 = vpop.f32.mrb[0].mxu0
    %v753 = vadd.f32 0.0, %v752
    %v754 = vpop.f32.mrb[0].mxu0
    %755 = vdwg.mxu0
    %v756 = vadd.f32 %v680, %v753
    %v757 = vmul.f32 %v756, %v68
    %v758 = vtanh.pop %v757
    %v759 = vmul.f32 %v758, %v68
    %v760 = vadd.f32 %v759, %v69
    %v761 = vmul.f32 %v760, %v672
    %763 = vrot.lane.b32.xlu0 %v760, 64
    %v764 = vpop.permute.xlu0 %763
    %v766 = vmul.f32 %v760, %v764
    %768 = vrot.lane.b32.xlu0 %v766, 32
    %v769 = vpop.permute.xlu0 %768
    %v771 = vadd.f32 %v761, %v769
    %v772 = vtanh.pop %v771
    %774 = vrot.lane.b32.xlu0 %v772, 64
    %v775 = vpop.permute.xlu0 %774
    %v777 = vmul.f32 %v760, %v775
    %s778 = scalar_lea.vmem [#allocation2], 56
    %v779 = vld [vmem:[%s778] sm:$0xff]
    %781 = vrot.lane.b32.xlu0 %v777, 32
    %v782 = vpop.permute.xlu0 %781
    %v783 = vsel %vm71, %v782, 0
    %785 = vmatprep.subr.mxu0 0.0
    %786 = vmatpush1.msra.mxu0 %v57
    %787 = vmatprep.subr.mxu0 0.0
    %788 = vmatpush1.msra.mxu0 %v58
    %789 = vmatprep.subr.mxu0 0.0
    %790 = vmatpush1.msra.mxu0 %v59
    %791 = vmatprep.subr.mxu0 0.0
    %792 = vmatpush1.msra.mxu0 %v60
    %793 = vmatprep.subr.mxu0 0.0
    %794 = vmatpush1.msra.mxu0 0.0
    %795 = vmatprep.subr.mxu0 0.0
    %796 = vmatpush1.msra.mxu0 0.0
    %797 = vmatprep.subr.mxu0 0.0
    %798 = vmatpush1.msra.mxu0 0.0
    %799 = vmatprep.subr.mxu0 0.0
    %800 = vmatpush1.msra.mxu0 0.0
    %801 = vmatprep.subr.mxu0 0.0
    %802 = vmatpush1.msra.mxu0 0.0
    %803 = vmatprep.subr.mxu0 0.0
    %804 = vmatpush1.msra.mxu0 0.0
    %805 = vmatprep.subr.mxu0 0.0
    %806 = vmatpush1.msra.mxu0 0.0
    %807 = vmatprep.subr.mxu0 0.0
    %808 = vmatpush1.msra.mxu0 0.0
    %809 = vmatprep.subr.mxu0 0.0
    %810 = vmatpush1.msra.mxu0 0.0
    %811 = vmatprep.subr.mxu0 0.0
    %812 = vmatpush1.msra.mxu0 0.0
    %813 = vmatprep.subr.mxu0 0.0
    %814 = vmatpush1.msra.mxu0 0.0
    %815 = vmatprep.subr.mxu0 0.0
    %816 = vmatpush1.msra.mxu0 0.0
    %817 = vmatprep.subr.mxu0 0.0
    %818 = vmatpush1.msra.mxu0 0.0
    %819 = vmatprep.subr.mxu0 0.0
    %820 = vmatpush1.msra.mxu0 0.0
    %821 = vmatprep.subr.mxu0 0.0
    %822 = vmatpush1.msra.mxu0 0.0
    %823 = vmatprep.subr.mxu0 0.0
    %824 = vmatpush1.msra.mxu0 0.0
    %825 = vmatprep.subr.mxu0 0.0
    %826 = vmatpush1.msra.mxu0 0.0
    %827 = vmatprep.subr.mxu0 0.0
    %828 = vmatpush1.msra.mxu0 0.0
    %829 = vmatprep.subr.mxu0 0.0
    %830 = vmatpush1.msra.mxu0 0.0
    %831 = vmatprep.subr.mxu0 0.0
    %832 = vmatpush1.msra.mxu0 0.0
    %833 = vmatprep.subr.mxu0 0.0
    %834 = vmatpush1.msra.mxu0 0.0
    %835 = vmatprep.subr.mxu0 0.0
    %836 = vmatpush1.msra.mxu0 0.0
    %837 = vmatprep.subr.mxu0 0.0
    %838 = vmatpush1.msra.mxu0 0.0
    %839 = vmatprep.subr.mxu0 0.0
    %840 = vmatpush1.msra.mxu0 0.0
    %841 = vmatprep.subr.mxu0 0.0
    %842 = vmatpush1.msra.mxu0 0.0
    %843 = vmatprep.subr.mxu0 0.0
    %844 = vmatpush1.msra.mxu0 0.0
    %845 = vmatprep.subr.mxu0 0.0
    %846 = vmatpush1.msra.mxu0 0.0
    %847 = vmatprep.subr.mxu0 0.0
    %848 = vmatpush1.msra.mxu0 0.0
    %849 = vmatprep.mubr.f32.mxu0 0.0
    %850 = vmatmul.mubr.f32.gmra.mrb[0].mxu0 %v783
    %v851 = vpop.f32.mrb[0].mxu0
    %v852 = vadd.f32 0.0, %v851
    %v853 = vpop.f32.mrb[0].mxu0
    %854 = vdwg.mxu0
    %v855 = vadd.f32 %v779, %v852
    %v856 = vmul.f32 %v855, %v68
    %v857 = vtanh.pop %v856
    %v858 = vmul.f32 %v857, %v68
    %v859 = vadd.f32 %v858, %v69
    %v860 = vmul.f32 %v859, %v771
    %862 = vrot.lane.b32.xlu0 %v859, 64
    %v863 = vpop.permute.xlu0 %862
    %v865 = vmul.f32 %v859, %v863
    %867 = vrot.lane.b32.xlu0 %v865, 32
    %v868 = vpop.permute.xlu0 %867
    %v870 = vadd.f32 %v860, %v868
    %v871 = vtanh.pop %v870
    %873 = vrot.lane.b32.xlu0 %v871, 64
    %v874 = vpop.permute.xlu0 %873
    %v876 = vmul.f32 %v859, %v874
    %878 = vrot.lane.b32.xlu0 %v678, 64
    %v879 = vpop.permute.xlu0 %878
    %881 = vrot.lane.b32.xlu0 %v777, 96
    %v882 = vpop.permute.xlu0 %881
    %v884 = vsel %vm71, %v584, %v879
    %v885 = vsel %vm476, %v884, %v882
    %v886 = vsel %vm478, %v885, %v876
    %887 = vst [vmem:[#allocation8 + $0x8] sm:$0xff] %v886
    // Predicated region
    $region30: #{tpu_custom_call.1} parent=1 // pred_check
      _
    $region31: #{tpu_custom_call.1} parent=1 // pred_check_branch
      %889 = sbr.rel (0) target = $region33
    $region32: #{tpu_custom_call.1} parent=1 // pred_region
      %s891 = ssub.s32 256, 256
      %892 = vsyncadd [#allocation4], %s891
      %s894 = sshll.u32 [#allocation8], 4
      %s895 = int_to_ptr.vmem [resolvable:$true] %s894
      %897 = dma.vmem_to_hbm [thread:$0]  %s895, 256, %s4, [#allocation4]
    $region33: #{tpu_custom_call.1} parent=1 // pred_fallthru
      _
    // Predicated region
    $region34: #{tpu_custom_call.1} parent=1 // pred_check
      _
    $region35: #{tpu_custom_call.1} parent=1 // pred_check_branch
      %899 = sbr.rel (0) target = $region37
    $region36: #{tpu_custom_call.1} parent=1 // pred_region
      %900 = dma.done [#allocation4], 256
    $region37: #{tpu_custom_call.1} parent=1 // pred_fallthru
      _
    %901 = vsyncpa [#allocation3], 1
    %902 = vsyncpa [#allocation6], 1
    %903 = vsyncpa [#allocation4], 1

</llo_original>
